<compile_context>
chip_gen: v7x
topology: tpu7x:2x2x1
jax: 0.10.0
libtpu: 0.0.40
codegen_flags: <defaults>
</compile_context>

<pallas_src>
import functools

import jax
import jax.numpy as jnp
from jax.experimental import pallas as pl
from jax.experimental.pallas import tpu as pltpu


def _round_up(x, m):
    return (x + m - 1) // m * m


def _downconv1d_kernel(x_ref, w1_ref, b1_ref, w2_ref, b2_ref, o_ref, *, q_offsets):
    """One (batch b, time-tile i) grid step.

    x_ref : (P, stride*C_in)               phase-folded padded input, batch b
    w1_ref: (n_q, stride*C_in, 2*half_pad) conv1 weights folded per phase q,
                                           [value | gate] halves concatenated
    b1_ref: (1, 2*half_pad)                conv1 bias, [value | gate] (f32)
    w2_ref: (half_pad, c_out_pad)          1x1 conv2 weight
    b2_ref: (1, c_out_pad)                 conv2 bias (f32)
    o_ref : (tm, c_out_pad)                output tile (lane-dense)
    """
    tm = o_ref.shape[0]
    half_pad = w1_ref.shape[-1] // 2
    i = pl.program_id(1)
    row0 = pl.multiple_of(i * tm, tm)          # first output row of this tile

    # conv1: one matmul per distinct phase offset q, accumulated in f32.
    # Output row j, tap k reads padded-input time
    #   t = j*stride + k*dilation = (j + q_k)*stride + r_k
    # i.e. phase-folded row (j + q_k); the r_k placement is baked into w1's
    # rows on the host, so each span is consumed whole (no in-vreg lane slice).
    acc = None
    for qi, q in enumerate(q_offsets):         # static unroll, n_q is small
        span = x_ref[pl.ds(row0 + q, tm), :]   # (tm, stride*C_in) contiguous
        part = jnp.dot(span, w1_ref[qi], preferred_element_type=jnp.float32)
        acc = part if acc is None else acc + part
    acc = acc + b1_ref[...]

    # GLU: value * sigmoid(gate).  The split is at the 128-aligned half_pad
    # lane boundary (free).  Padded value lanes are exactly 0 (zero weights,
    # zero bias) and conv2's padded weight rows are exactly 0, so padding
    # contributes nothing to the output.
    glu = (acc[:, :half_pad] * jax.nn.sigmoid(acc[:, half_pad:])).astype(w2_ref.dtype)

    # 1x1 conv2 as a matmul + bias; lane-dense store.
    out = jnp.dot(glu, w2_ref[...], preferred_element_type=jnp.float32)
    o_ref[...] = (out + b2_ref[...]).astype(o_ref.dtype)


def down_conv1d(x, w1, b1, w2, b2, *, stride=1, padding=0, dilation=1,
                block_t=256, compute_dtype=jnp.bfloat16):
    """Fused DownConv1d forward.

    x : (B, T, C_in)
    w1: (C_out, C_in, K)   torch Conv1d weight layout;   b1: (C_out,)
    w2: (C_out, C_out//2)  torch 1x1 Conv1d weight (squeezed);   b2: (C_out,)
    returns (B, T_out, C_out) in x.dtype.
    """
    B, T, C_in = x.shape
    C_out, C_in_w, K = w1.shape
    assert C_in_w == C_in and C_out % 2 == 0
    half = C_out // 2

    T_conv = T + 2 * padding
    T_out = (T_conv - dilation * (K - 1) - 1) // stride + 1
    assert T_out > 0

    # ---- tiling geometry: (8,128)-aligned, lane-dense blocks ----------------
    tm = max(8, min(_round_up(block_t, 8), _round_up(T_out, 8)))
    n_t = pl.cdiv(T_out, tm)
    T_out_pad = n_t * tm                       # pad the time axis, don't assert
    half_pad = _round_up(half, 128)
    c_out_pad = _round_up(C_out, 128)

    # ---- phase-folded, zero-padded input (no im2col materialization) --------
    q_max = ((K - 1) * dilation) // stride
    P = max(T_out_pad + q_max, pl.cdiv(T_conv, stride))
    T_alloc = P * stride
    # NOTE: this pad/reshape/cast is one fused extra HBM pass over the input;
    # producing x in compute_dtype upstream (or opting the x operand into XLA
    # input fusion) removes it for memory-bound configs.
    x_pad = jnp.pad(x, ((0, 0), (padding, T_alloc - padding - T), (0, 0)))
    x_ph = x_pad.reshape(B, P, stride * C_in).astype(compute_dtype)

    # ---- conv1 weights: fold taps per phase offset q, concat GLU halves -----
    # Tap k: k*dilation = q_k*stride + r_k.  All taps sharing q are packed into
    # one (stride*C_in, 2*half_pad) matrix with w1[k]^T at rows
    # r_k*C_in:(r_k+1)*C_in; value half -> cols [0, half), gate half ->
    # cols [half_pad, half_pad+half).  Unused rows / padded cols stay zero
    # (required for the GLU / conv2 zero-padding invariant).
    qr = [divmod(k * dilation, stride) for k in range(K)]
    q_list = sorted({q for q, _ in qr})
    n_q = len(q_list)
    w1_t = jnp.transpose(w1, (2, 1, 0)).astype(jnp.float32)    # (K, C_in, C_out)
    w1_fold = jnp.zeros((n_q, stride * C_in, 2 * half_pad), jnp.float32)
    for k, (q, r) in enumerate(qr):
        qi = q_list.index(q)
        w1_fold = w1_fold.at[qi, r * C_in:(r + 1) * C_in, :half].set(
            w1_t[k, :, :half])
        w1_fold = w1_fold.at[qi, r * C_in:(r + 1) * C_in,
                             half_pad:half_pad + half].set(w1_t[k, :, half:])
    w1_fold = w1_fold.astype(compute_dtype)
    b1_cat = jnp.zeros((1, 2 * half_pad), jnp.float32)
    b1_cat = b1_cat.at[0, :half].set(b1[:half].astype(jnp.float32))
    b1_cat = b1_cat.at[0, half_pad:half_pad + half].set(b1[half:].astype(jnp.float32))

    # 1x1 conv2 as a (half_pad, c_out_pad) matmul weight; padded rows/cols = 0.
    w2_mat = jnp.pad(w2.T, ((0, half_pad - half), (0, c_out_pad - C_out)))
    w2_mat = w2_mat.astype(compute_dtype)
    b2_row = jnp.pad(b2, (0, c_out_pad - C_out)).reshape(1, c_out_pad)
    b2_row = b2_row.astype(jnp.float32)

    kernel = functools.partial(_downconv1d_kernel, q_offsets=tuple(q_list))

    # ---- explicit VMEM budget (defaults are only 16/32 MiB scoped) ----------
    comp_sz = jnp.dtype(compute_dtype).itemsize
    out_sz = jnp.dtype(x.dtype).itemsize
    resident = 2 * (P * stride * C_in * comp_sz                      # x block
                    + n_q * stride * C_in * 2 * half_pad * comp_sz   # w1
                    + half_pad * c_out_pad * comp_sz                 # w2
                    + (2 * half_pad + c_out_pad) * 4                 # biases
                    + tm * c_out_pad * out_sz)                       # out block
    scratch = tm * (2 * half_pad + half_pad + c_out_pad) * 4         # acc/glu/out
    vmem_limit = int(min(max(1.5 * (resident + scratch) + (4 << 20), 32 << 20),
                         127 << 20))

    cost = pl.CostEstimate(
        flops=int(2 * B * T_out_pad
                  * (n_q * stride * C_in * 2 * half_pad + half_pad * c_out_pad)),
        transcendentals=int(B * T_out_pad * half_pad),
        bytes_accessed=int(
            x_ph.size * comp_sz
            + (w1_fold.size + w2_mat.size) * comp_sz
            + (b1_cat.size + b2_row.size) * 4
            + B * T_out_pad * c_out_pad * out_sz),
    )

    out = pl.pallas_call(
        kernel,
        out_shape=jax.ShapeDtypeStruct((B, T_out_pad, c_out_pad), x.dtype),
        grid_spec=pltpu.PrefetchScalarGridSpec(
            num_scalar_prefetch=0,
            grid=(B, n_t),
            in_specs=[
                # Whole phase-folded time axis per batch; constant index along
                # the time-tile axis -> DMA'd once per batch, then revisited.
                # (For very long T on v7x's 64 MiB VMEM, the next step would be
                # memory_space=pl.ANY + manual double-buffered DMA of rows
                # [i*tm, i*tm+tm+q_max); not needed at these sizes.)
                pl.BlockSpec((None, P, stride * C_in), lambda b, i: (b, 0, 0)),
                # Weights / biases: constant index -> resident in VMEM.
                pl.BlockSpec((n_q, stride * C_in, 2 * half_pad),
                             lambda b, i: (0, 0, 0)),
                pl.BlockSpec((1, 2 * half_pad), lambda b, i: (0, 0)),
                pl.BlockSpec((half_pad, c_out_pad), lambda b, i: (0, 0)),
                pl.BlockSpec((1, c_out_pad), lambda b, i: (0, 0)),
            ],
            out_specs=pl.BlockSpec((None, tm, c_out_pad), lambda b, i: (b, i, 0)),
        ),
        compiler_params=pltpu.CompilerParams(
            dimension_semantics=("parallel", "parallel"),
            vmem_limit_bytes=vmem_limit),
        cost_estimate=cost,
    )(x_ph, w1_fold, b1_cat, w2_mat, b2_row)

    return out[:, :T_out, :C_out]


def _reference(x, w1, b1, w2, b2, *, stride, padding, dilation):
    """Plain-JAX reference using lax conv (NCW), mirroring the torch module."""
    x_ncl = jnp.transpose(x, (0, 2, 1))
    h = jax.lax.conv_general_dilated(
        x_ncl, w1, window_strides=(stride,), padding=[(padding, padding)],
        rhs_dilation=(dilation,),
        dimension_numbers=("NCH", "OIH", "NCH"))
    h = h + b1[None, :, None]
    half = h.shape[1] // 2
    g = h[:, :half] * jax.nn.sigmoid(h[:, half:])
    o = jnp.einsum("bct,oc->bot", g, w2) + b2[None, :, None]
    return jnp.transpose(o, (0, 2, 1))


if __name__ == "__main__":
    # Small shapes consistent with the module's forward.
    B, T, C_in = 2, 16, 8
    C_out, K = 16, 3
    stride, padding, dilation = 2, 1, 1

    key = jax.random.PRNGKey(0)
    kx, k1, k2, k3, k4 = jax.random.split(key, 5)
    x = jax.random.normal(kx, (B, T, C_in), dtype=jnp.float32)
    w1 = 0.1 * jax.random.normal(k1, (C_out, C_in, K), dtype=jnp.float32)
    b1 = 0.1 * jax.random.normal(k2, (C_out,), dtype=jnp.float32)
    w2 = 0.1 * jax.random.normal(k3, (C_out, C_out // 2), dtype=jnp.float32)
    b2 = 0.1 * jax.random.normal(k4, (C_out,), dtype=jnp.float32)

    y_ref = _reference(x, w1, b1, w2, b2,
                       stride=stride, padding=padding, dilation=dilation)

    # f32 compute path: tight numerical check vs. the reference.
    y_f32 = down_conv1d(x, w1, b1, w2, b2, stride=stride, padding=padding,
                        dilation=dilation, compute_dtype=jnp.float32)
    y_f32 = jax.block_until_ready(y_f32)
    assert y_f32.shape == y_ref.shape
    assert jnp.allclose(y_f32, y_ref, atol=1e-5, rtol=1e-5), "f32 mismatch"

    # Default bf16 compute path (f32 accumulation): looser tolerance.
    y_bf16 = down_conv1d(x, w1, b1, w2, b2, stride=stride, padding=padding,
                         dilation=dilation)
    y_bf16 = jax.block_until_ready(y_bf16)
    assert y_bf16.shape == y_ref.shape
    assert jnp.allclose(y_bf16, y_ref, atol=5e-2, rtol=5e-2), "bf16 mismatch"

    print("KERNEL_OK")
</pallas_src>

<mosaic_0001>
module attributes {stable_mosaic.version = 11 : i64} {
  func.func @_downconv1d_kernel(%arg0: i32, %arg1: i32, %arg2: memref<1x9x16xf32, #tpu.memory_space<vmem>>, %arg3: memref<2x16x256xf32, #tpu.memory_space<vmem>>, %arg4: memref<1x256xf32, #tpu.memory_space<vmem>>, %arg5: memref<128x128xf32, #tpu.memory_space<vmem>>, %arg6: memref<1x128xf32, #tpu.memory_space<vmem>>, %arg7: memref<1x8x128xf32, #tpu.memory_space<vmem>>) attributes {dimension_semantics = [#tpu.dimension_semantics<parallel>, #tpu.dimension_semantics<parallel>], iteration_bounds = array<i64: 2, 1>, scalar_prefetch = 0 : i64, scratch_operands = 0 : i64, tpu.core_type = #tpu.core_type<tc>, window_params = [{transform_indices = @transform_0, window_bounds = array<i64: 1, 9, 16>}, {pipeline_mode = #tpu.pipeline_mode<synchronous>, transform_indices = @transform_1, window_bounds = array<i64: 2, 16, 256>}, {pipeline_mode = #tpu.pipeline_mode<synchronous>, transform_indices = @transform_2, window_bounds = array<i64: 1, 256>}, {pipeline_mode = #tpu.pipeline_mode<synchronous>, transform_indices = @transform_3, window_bounds = array<i64: 128, 128>}, {pipeline_mode = #tpu.pipeline_mode<synchronous>, transform_indices = @transform_4, window_bounds = array<i64: 1, 128>}, {transform_indices = @transform_5, window_bounds = array<i64: 1, 8, 128>}]} {
    %c8_i32 = arith.constant 8 : i32
    %0 = arith.muli %arg1, %c8_i32 : i32
    %1 = tpu.assume_multiple %0, 8 : i32
    %c0_i32 = arith.constant 0 : i32
    %2 = arith.addi %1, %c0_i32 : i32
    %c0 = arith.constant 0 : index
    %3 = arith.index_cast %2 : i32 to index
    %c0_0 = arith.constant 0 : index
    %4 = vector.load %arg2[%c0, %3, %c0_0] : memref<1x9x16xf32, #tpu.memory_space<vmem>>, vector<1x8x16xf32>
    %5 = vector.shape_cast %4 : vector<1x8x16xf32> to vector<8x16xf32>
    %c0_1 = arith.constant 0 : index
    %c0_2 = arith.constant 0 : index
    %c0_3 = arith.constant 0 : index
    %6 = vector.load %arg3[%c0_1, %c0_2, %c0_3] : memref<2x16x256xf32, #tpu.memory_space<vmem>>, vector<1x16x256xf32>
    %7 = vector.shape_cast %6 : vector<1x16x256xf32> to vector<16x256xf32>
    %cst = arith.constant dense<0.000000e+00> : vector<8x256xf32>
    %8 = tpu.matmul %5, %7, %cst {dimension_numbers = #tpu.dot_dimension_numbers<[1], [0], [0], [1], [0, 0, 1, 1], [], []>} : vector<8x16xf32>, vector<16x256xf32>, vector<8x256xf32> -> vector<8x256xf32>
    %c1_i32 = arith.constant 1 : i32
    %9 = arith.addi %1, %c1_i32 : i32
    %c0_4 = arith.constant 0 : index
    %10 = arith.index_cast %9 : i32 to index
    %c0_5 = arith.constant 0 : index
    %11 = vector.load %arg2[%c0_4, %10, %c0_5] : memref<1x9x16xf32, #tpu.memory_space<vmem>>, vector<1x8x16xf32>
    %12 = vector.shape_cast %11 : vector<1x8x16xf32> to vector<8x16xf32>
    %c1 = arith.constant 1 : index
    %c0_6 = arith.constant 0 : index
    %c0_7 = arith.constant 0 : index
    %13 = vector.load %arg3[%c1, %c0_6, %c0_7] : memref<2x16x256xf32, #tpu.memory_space<vmem>>, vector<1x16x256xf32>
    %14 = vector.shape_cast %13 : vector<1x16x256xf32> to vector<16x256xf32>
    %cst_8 = arith.constant dense<0.000000e+00> : vector<8x256xf32>
    %15 = tpu.matmul %12, %14, %cst_8 {dimension_numbers = #tpu.dot_dimension_numbers<[1], [0], [0], [1], [0, 0, 1, 1], [], []>} : vector<8x16xf32>, vector<16x256xf32>, vector<8x256xf32> -> vector<8x256xf32>
    %16 = arith.addf %8, %15 : vector<8x256xf32>
    %c0_9 = arith.constant 0 : index
    %c0_10 = arith.constant 0 : index
    %17 = vector.load %arg4[%c0_9, %c0_10] : memref<1x256xf32, #tpu.memory_space<vmem>>, vector<1x256xf32>
    %18 = vector.broadcast %17 : vector<1x256xf32> to vector<8x256xf32>
    %19 = arith.addf %16, %18 : vector<8x256xf32>
    %20 = vector.extract_strided_slice %19 {offsets = [0, 0], sizes = [8, 128], strides = [1, 1]} : vector<8x256xf32> to vector<8x128xf32>
    %21 = vector.extract_strided_slice %19 {offsets = [0, 128], sizes = [8, 128], strides = [1, 1]} : vector<8x256xf32> to vector<8x128xf32>
    %22 = arith.negf %21 : vector<8x128xf32>
    %23 = math.exp %22 : vector<8x128xf32>
    %cst_11 = arith.constant 1.000000e+00 : f32
    %24 = vector.broadcast %cst_11 : f32 to vector<8x128xf32>
    %25 = arith.addf %24, %23 : vector<8x128xf32>
    %26 = arith.divf %24, %25 : vector<8x128xf32>
    %27 = arith.mulf %20, %26 : vector<8x128xf32>
    %c0_12 = arith.constant 0 : index
    %c0_13 = arith.constant 0 : index
    %28 = vector.load %arg5[%c0_12, %c0_13] : memref<128x128xf32, #tpu.memory_space<vmem>>, vector<128x128xf32>
    %cst_14 = arith.constant dense<0.000000e+00> : vector<8x128xf32>
    %29 = tpu.matmul %27, %28, %cst_14 {dimension_numbers = #tpu.dot_dimension_numbers<[1], [0], [0], [1], [0, 0, 1, 1], [], []>} : vector<8x128xf32>, vector<128x128xf32>, vector<8x128xf32> -> vector<8x128xf32>
    %c0_15 = arith.constant 0 : index
    %c0_16 = arith.constant 0 : index
    %30 = vector.load %arg6[%c0_15, %c0_16] : memref<1x128xf32, #tpu.memory_space<vmem>>, vector<1x128xf32>
    %31 = vector.broadcast %30 : vector<1x128xf32> to vector<8x128xf32>
    %32 = arith.addf %29, %31 : vector<8x128xf32>
    %c0_17 = arith.constant 0 : index
    %c0_18 = arith.constant 0 : index
    %c0_19 = arith.constant 0 : index
    %33 = vector.load %arg7[%c0_17, %c0_18, %c0_19] : memref<1x8x128xf32, #tpu.memory_space<vmem>>, vector<1x8x128xf32>
    %34 = vector.shape_cast %33 : vector<1x8x128xf32> to vector<8x128xf32>
    %35 = vector.shape_cast %32 : vector<8x128xf32> to vector<1x8x128xf32>
    tpu.vector_store %arg7[%c0_17, %c0_18, %c0_19], %35 {strides = array<i32>} : memref<1x8x128xf32, #tpu.memory_space<vmem>>, vector<1x8x128xf32>,
    return
  }
  func.func @transform_0(%arg0: i32, %arg1: i32) -> (i32, i32, i32) {
    %c0_i32 = arith.constant 0 : i32
    %c0_i32_0 = arith.constant 0 : i32
    %c0_i32_1 = arith.constant 0 : i32
    return %arg0, %c0_i32, %c0_i32_0 : i32, i32, i32
  }
  func.func @transform_1(%arg0: i32, %arg1: i32) -> (i32, i32, i32) {
    %c0_i32 = arith.constant 0 : i32
    %c0_i32_0 = arith.constant 0 : i32
    %c0_i32_1 = arith.constant 0 : i32
    %c0_i32_2 = arith.constant 0 : i32
    return %c0_i32, %c0_i32_0, %c0_i32_1 : i32, i32, i32
  }
  func.func @transform_2(%arg0: i32, %arg1: i32) -> (i32, i32) {
    %c0_i32 = arith.constant 0 : i32
    %c0_i32_0 = arith.constant 0 : i32
    %c0_i32_1 = arith.constant 0 : i32
    return %c0_i32, %c0_i32_0 : i32, i32
  }
  func.func @transform_3(%arg0: i32, %arg1: i32) -> (i32, i32) {
    %c0_i32 = arith.constant 0 : i32
    %c0_i32_0 = arith.constant 0 : i32
    %c0_i32_1 = arith.constant 0 : i32
    return %c0_i32, %c0_i32_0 : i32, i32
  }
  func.func @transform_4(%arg0: i32, %arg1: i32) -> (i32, i32) {
    %c0_i32 = arith.constant 0 : i32
    %c0_i32_0 = arith.constant 0 : i32
    %c0_i32_1 = arith.constant 0 : i32
    return %c0_i32, %c0_i32_0 : i32, i32
  }
  func.func @transform_5(%arg0: i32, %arg1: i32) -> (i32, i32, i32) {
    %c0_i32 = arith.constant 0 : i32
    %c0_i32_0 = arith.constant 0 : i32
    return %arg0, %arg1, %c0_i32 : i32, i32, i32
  }
}

</mosaic_0001>

<llo_original>
// kernel: tpu_custom_call.1
$region0: #{tpu_custom_call.1}
  #allocation0 [shape = 'u32[]', space=smem, size = 0x4, offset = 0x4, fixed_abs, tag = 'smem constant byte address 0x4 - core index']
  #allocation1 [shape = 'u32[144,128]{1,0:T(1,128)}', space=vmem, size = 0x12000, scoped, tag = 'internal scratch']
  %s0 = inlined_call_operand.vmem [shape: f32[2,9,16], index: 0, kind: input, shape index: {}]
  %s1 = inlined_call_operand.hbm [shape: f32[2,16,256], index: 1, kind: input, shape index: {}]
  %s2 = inlined_call_operand.vmem [shape: f32[1,256], index: 2, kind: input, shape index: {}]
  %s3 = inlined_call_operand.hbm [shape: f32[128,128], index: 3, kind: input, shape index: {}]
  %s4 = inlined_call_operand.vmem [shape: f32[1,128], index: 4, kind: input, shape index: {}]
  %s5 = inlined_call_operand.hbm [shape: f32[2,8,128], index: 5, kind: output, shape index: {}]
  %s6 = sld [smem:[#allocation0]]
  $region61: #{tpu_custom_call.1} parent=0
    _
  %s8 = ssub.s32 1, %s6
  %s9 = scalar_select 0, %s8, %s6
  $region1: #{tpu_custom_call.1} parent=0
    #allocation2 [shape = 'u8[32768]{0}', space=vmem, size = 0x8000, scoped, tag = 'input window, operand 1, single buffered']
    #allocation3 [shape = 's32[2]{0}', space=sflag, size = 0x8, scoped, tag = 'scoped memory for tpu_custom_call.1']
    #allocation4 [shape = 's32[2]{0}', space=sflag, size = 0x8, scoped, tag = 'scoped memory for tpu_custom_call.1']
    #allocation5 [shape = 'u8[65536]{0}', space=vmem, size = 0x10000, scoped, tag = 'input window, operand 3, single buffered']
    #allocation6 [shape = 's32[1]{0}', space=sflag, size = 0x4, scoped, tag = 'scoped memory for tpu_custom_call.1']
    #allocation7 [shape = 'u8[8192]{0}', space=vmem, size = 0x2000, scoped, tag = 'output window, operand 0']
    %10 = vsyncpa [#allocation3], 0
    %11 = vsyncpa [#allocation6], 0
    %12 = vsyncpa [#allocation4], 0
    %s13 = scalar_lea.sflag [#allocation4], 1
    %14 = vsyncpa %s13, 0
    loop: start=0, step=1, limit=4
    $region2: #{tpu_custom_call.1} parent=1 // loop_pre_header
      _
    $region3: #{tpu_custom_call.1} parent=1 // loop_header
      %s16 = sphi 0, %s20
      %p17 = scmp.ge.s32.totalorder %s16, 4
      %s23 = sphi 0, %s35
      %s24 = sphi 0, %s31
      %s25 = sphi 0, %s23
      %s26 = sphi 0, %s24
      %s27 = sphi 0, %s25
      %s28 = sphi 0, %s26
      %s38 = sphi 0, %s40
      %s41 = sphi 0, %s38
      %s42 = sphi 0, %s41
      %s58 = sphi 0, %s42
      %s62 = sphi 0, %s62
      %s64 = sphi 0, %s62
      %s65 = sphi 0, %s64
      %s79 = sphi 0, %s65
      %s83 = sphi 0, %s83
      %s85 = sphi 0, %s83
      %s86 = sphi 0, %s85
      %s100 = sphi 0, %s86
      %s104 = sphi 0, %s104
      %s106 = sphi 0, %s104
      %s107 = sphi 0, %s106
      %s121 = sphi 0, %s107
      %s125 = sphi 0, %s125
      %s127 = sphi 0, %s125
      %s128 = sphi 0, %s127
      %s142 = sphi 0, %s128
      %s150 = sphi 0, %s152
      %s153 = sphi 0, %s150
      %s154 = sphi 0, %s153
      %s170 = sphi 0, %s154
    $region4: #{tpu_custom_call.1} parent=1 // loop_header_branch
      %19 = sbr.rel (%p17) target = $region8
    $region5: #{tpu_custom_call.1} parent=1 // loop_body
      %s21 = ssub.s32 %s16, 1
      %s22 = ssub.s32 %s16, 2
      %s29 = sadd.s32 1, %s24
      %p30 = scmp.ge.s32.totalorder %s29, 1
      %s31 = scalar_select %p30, 0, %s29
      %s32 = sadd.s32 1, %s23
      %s33 = scalar_select %p30, %s32, %s23
      %p34 = scmp.ge.s32.totalorder %s33, 2
      %s35 = scalar_select %p34, 0, %s33
      %s36 = ssub.s32 %s23, %s35
      %p37 = scmp.eq.s32.totalorder %s36, 0
      %s39 = sadd.s32 %s38, 1
      %s40 = scalar_select %p37, %s38, %s39
      %p43 = pneg %p37
      %p44 = scmp.eq.s32.totalorder %s16, 1
      %p45 = por %p43, %p44
      %p46 = scmp.ne.s32.totalorder %s38, %s41
      %p47 = scmp.eq.s32.totalorder %s16, 0
      %p48 = por %p46, %p47
      %p49 = scmp.ne.s32.totalorder %s38, %s41
      %p50 = scmp.eq.s32.totalorder %s21, 1
      %p51 = por %p49, %p50
      %p52 = scmp.ne.s32.totalorder %s41, %s42
      %p53 = scmp.eq.s32.totalorder %s21, 0
      %p54 = por %p52, %p53
      %p55 = scmp.ne.s32.totalorder %s41, %s42
      %p56 = scmp.eq.s32.totalorder %s22, 1
      %p57 = por %p55, %p56
      %p59 = scmp.ne.s32.totalorder %s42, %s58
      %p60 = scmp.eq.s32.totalorder %s22, 0
      %p61 = por %p59, %p60
      %s63 = sadd.s32 %s62, 1
      %p66 = scmp.eq.s32.totalorder %s16, 1
      %p67 = scmp.ne.s32.totalorder %s62, %s64
      %p68 = scmp.eq.s32.totalorder %s16, 0
      %p69 = por %p67, %p68
      %p70 = scmp.ne.s32.totalorder %s62, %s64
      %p71 = scmp.eq.s32.totalorder %s21, 1
      %p72 = por %p70, %p71
      %p73 = scmp.ne.s32.totalorder %s64, %s65
      %p74 = scmp.eq.s32.totalorder %s21, 0
      %p75 = por %p73, %p74
      %p76 = scmp.ne.s32.totalorder %s64, %s65
      %p77 = scmp.eq.s32.totalorder %s22, 1
      %p78 = por %p76, %p77
      %p80 = scmp.ne.s32.totalorder %s65, %s79
      %p81 = scmp.eq.s32.totalorder %s22, 0
      %p82 = por %p80, %p81
      %s84 = sadd.s32 %s83, 1
      %p87 = scmp.eq.s32.totalorder %s16, 1
      %p88 = scmp.ne.s32.totalorder %s83, %s85
      %p89 = scmp.eq.s32.totalorder %s16, 0
      %p90 = por %p88, %p89
      %p91 = scmp.ne.s32.totalorder %s83, %s85
      %p92 = scmp.eq.s32.totalorder %s21, 1
      %p93 = por %p91, %p92
      %p94 = scmp.ne.s32.totalorder %s85, %s86
      %p95 = scmp.eq.s32.totalorder %s21, 0
      %p96 = por %p94, %p95
      %p97 = scmp.ne.s32.totalorder %s85, %s86
      %p98 = scmp.eq.s32.totalorder %s22, 1
      %p99 = por %p97, %p98
      %p101 = scmp.ne.s32.totalorder %s86, %s100
      %p102 = scmp.eq.s32.totalorder %s22, 0
      %p103 = por %p101, %p102
      %s105 = sadd.s32 %s104, 1
      %p108 = scmp.eq.s32.totalorder %s16, 1
      %p109 = scmp.ne.s32.totalorder %s104, %s106
      %p110 = scmp.eq.s32.totalorder %s16, 0
      %p111 = por %p109, %p110
      %p112 = scmp.ne.s32.totalorder %s104, %s106
      %p113 = scmp.eq.s32.totalorder %s21, 1
      %p114 = por %p112, %p113
      %p115 = scmp.ne.s32.totalorder %s106, %s107
      %p116 = scmp.eq.s32.totalorder %s21, 0
      %p117 = por %p115, %p116
      %p118 = scmp.ne.s32.totalorder %s106, %s107
      %p119 = scmp.eq.s32.totalorder %s22, 1
      %p120 = por %p118, %p119
      %p122 = scmp.ne.s32.totalorder %s107, %s121
      %p123 = scmp.eq.s32.totalorder %s22, 0
      %p124 = por %p122, %p123
      %s126 = sadd.s32 %s125, 1
      %p129 = scmp.eq.s32.totalorder %s16, 1
      %p130 = scmp.ne.s32.totalorder %s125, %s127
      %p131 = scmp.eq.s32.totalorder %s16, 0
      %p132 = por %p130, %p131
      %p133 = scmp.ne.s32.totalorder %s125, %s127
      %p134 = scmp.eq.s32.totalorder %s21, 1
      %p135 = por %p133, %p134
      %p136 = scmp.ne.s32.totalorder %s127, %s128
      %p137 = scmp.eq.s32.totalorder %s21, 0
      %p138 = por %p136, %p137
      %p139 = scmp.ne.s32.totalorder %s127, %s128
      %p140 = scmp.eq.s32.totalorder %s22, 1
      %p141 = por %p139, %p140
      %p143 = scmp.ne.s32.totalorder %s128, %s142
      %p144 = scmp.eq.s32.totalorder %s22, 0
      %p145 = por %p143, %p144
      %s146 = ssub.s32 %s23, %s35
      %s147 = ssub.s32 %s24, %s31
      %s148 = sor.u32 %s146, %s147
      %p149 = scmp.eq.s32.totalorder %s148, 0
      %s151 = sadd.s32 %s150, 1
      %s152 = scalar_select %p149, %s150, %s151
      %p155 = pneg %p149
      %p156 = scmp.eq.s32.totalorder %s16, 1
      %p157 = por %p155, %p156
      %p158 = scmp.ne.s32.totalorder %s150, %s153
      %p159 = scmp.eq.s32.totalorder %s16, 0
      %p160 = por %p158, %p159
      %p161 = scmp.ne.s32.totalorder %s150, %s153
      %p162 = scmp.eq.s32.totalorder %s21, 1
      %p163 = por %p161, %p162
      %p164 = scmp.ne.s32.totalorder %s153, %s154
      %p165 = scmp.eq.s32.totalorder %s21, 0
      %p166 = por %p164, %p165
      %p167 = scmp.ne.s32.totalorder %s153, %s154
      %p168 = scmp.eq.s32.totalorder %s22, 1
      %p169 = por %p167, %p168
      %p171 = scmp.ne.s32.totalorder %s154, %s170
      %p172 = scmp.eq.s32.totalorder %s22, 0
      %p173 = por %p171, %p172
      %p174 = scmp.le.s32.totalorder 1, %s16
      %p175 = scmp.lt.s32.totalorder %s16, 3
      %p176 = pnand %p174, %p175
      %p177 = pneg %p176
      // Predicated region
      $region9: #{tpu_custom_call.1} parent=5 // pred_check
        _
      $region10: #{tpu_custom_call.1} parent=5 // pred_check_branch
        %179 = sbr.rel (%p176) target = $region12
      $region11: #{tpu_custom_call.1} parent=5 // pred_region
        %s180 = ssub.s32 %s16, 1
        // Predicated region
        $region13: #{tpu_custom_call.1} parent=11 // pred_check
          %p181 = pneg %p75
        $region14: #{tpu_custom_call.1} parent=11 // pred_check_branch
          %183 = sbr.rel (%p181) target = $region16
        $region15: #{tpu_custom_call.1} parent=11 // pred_region
          %s185 = ssub.s32 1024, 1024
          %186 = vsyncadd [#allocation3], %s185
          %s187 = sshll.u32 [#allocation2], 4
          %s188 = int_to_ptr.vmem [resolvable:$true] %s187
          %193 = dma.hbm_to_vmem [thread:$0]  %s1, 1024, %s188, [#allocation3], 256, 256, 16
        $region16: #{tpu_custom_call.1} parent=11 // pred_fallthru
          _
        // Predicated region
        $region17: #{tpu_custom_call.1} parent=11 // pred_check
          %p194 = pneg %p96
        $region18: #{tpu_custom_call.1} parent=11 // pred_check_branch
          %196 = sbr.rel (%p194) target = $region20
        $region19: #{tpu_custom_call.1} parent=11 // pred_region
          _
        $region20: #{tpu_custom_call.1} parent=11 // pred_fallthru
          _
        // Predicated region
        $region21: #{tpu_custom_call.1} parent=11 // pred_check
          %p197 = pneg %p117
        $region22: #{tpu_custom_call.1} parent=11 // pred_check_branch
          %199 = sbr.rel (%p197) target = $region24
        $region23: #{tpu_custom_call.1} parent=11 // pred_region
          %s201 = ssub.s32 2048, 2048
          %202 = vsyncadd [#allocation6], %s201
          %s203 = sshll.u32 [#allocation5], 4
          %s204 = int_to_ptr.vmem [resolvable:$true] %s203
          %209 = dma.hbm_to_vmem [thread:$0]  %s3, 2048, %s204, [#allocation6], 128, 128, 8
        $region24: #{tpu_custom_call.1} parent=11 // pred_fallthru
          _
        // Predicated region
        $region25: #{tpu_custom_call.1} parent=11 // pred_check
          %p210 = pneg %p138
        $region26: #{tpu_custom_call.1} parent=11 // pred_check_branch
          %212 = sbr.rel (%p210) target = $region28
        $region27: #{tpu_custom_call.1} parent=11 // pred_region
          _
        $region28: #{tpu_custom_call.1} parent=11 // pred_fallthru
          _
      $region12: #{tpu_custom_call.1} parent=5 // pred_fallthru
        _
      %p213 = scmp.lt.s32.totalorder %s16, 2
      // Predicated region
      $region29: #{tpu_custom_call.1} parent=5 // pred_check
        %p214 = pneg %p213
      $region30: #{tpu_custom_call.1} parent=5 // pred_check_branch
        %216 = sbr.rel (%p214) target = $region32
      $region31: #{tpu_custom_call.1} parent=5 // pred_region
        // Predicated region
        $region33: #{tpu_custom_call.1} parent=31 // pred_check
          %p217 = pneg %p48
        $region34: #{tpu_custom_call.1} parent=31 // pred_check_branch
          %219 = sbr.rel (%p217) target = $region36
        $region35: #{tpu_custom_call.1} parent=31 // pred_region
          %p220 = scmp.lt.s32.totalorder %s23, 1
          %s221 = scalar_select %p220, %s23, 1
          %s222 = smul.addr %s221, 2
          %s223 = smul.addr %s222, 8
          %s224 = scalar_lea.vmem %s0, %s223
        $region36: #{tpu_custom_call.1} parent=31 // pred_fallthru
          _
      $region32: #{tpu_custom_call.1} parent=5 // pred_fallthru
        _
      %p225 = scmp.le.s32.totalorder 1, %s16
      %p226 = scmp.lt.s32.totalorder %s16, 3
      %p227 = pnand %p225, %p226
      %p228 = pneg %p227
      // Predicated region
      $region37: #{tpu_custom_call.1} parent=5 // pred_check
        _
      $region38: #{tpu_custom_call.1} parent=5 // pred_check_branch
        %230 = sbr.rel (%p227) target = $region40
      $region39: #{tpu_custom_call.1} parent=5 // pred_region
        %s231 = ssub.s32 %s16, 1
        // Predicated region
        $region41: #{tpu_custom_call.1} parent=39 // pred_check
          %p232 = pneg %p75
        $region42: #{tpu_custom_call.1} parent=39 // pred_check_branch
          %234 = sbr.rel (%p232) target = $region44
        $region43: #{tpu_custom_call.1} parent=39 // pred_region
          %235 = dma.done [#allocation3], 1024
        $region44: #{tpu_custom_call.1} parent=39 // pred_fallthru
          _
        // Predicated region
        $region45: #{tpu_custom_call.1} parent=39 // pred_check
          %p236 = pneg %p117
        $region46: #{tpu_custom_call.1} parent=39 // pred_check_branch
          %238 = sbr.rel (%p236) target = $region48
        $region47: #{tpu_custom_call.1} parent=39 // pred_region
          %239 = dma.done [#allocation6], 2048
        $region48: #{tpu_custom_call.1} parent=39 // pred_fallthru
          _
        %p240 = scmp.lt.s32.totalorder %s25, 1
        %s241 = scalar_select %p240, %s25, 1
        %s242 = smul.addr %s241, 2
        %s243 = smul.addr %s242, 8
        %s244 = scalar_lea.vmem %s0, %s243
        %p245 = pneg %p54
        %p246 = pneg %p51
        %p247 = pneg %p75
        %p248 = pneg %p72
        %p249 = pneg %p96
        %p250 = pneg %p93
        %p251 = pneg %p117
        %p252 = pneg %p114
        %p253 = pneg %p138
        %p254 = pneg %p135
        %p255 = pneg %p166
        %p256 = pneg %p163
        %s257 = sand.u32 %s153, 1
        %s258 = scalar_lea.sflag [#allocation4], %s257
        %s259 = sand.u32 %s153, 1
        %s260 = smul.addr %s259, 8
        %s261 = scalar_lea.vmem [#allocation7], %s260
        %p262 = scmp.lt.s32.totalorder %s25, 1
        %s263 = scalar_select %p262, %s25, 1
        %s264 = smul.addr %s263, 2
        %s265 = smul.addr %s264, 8
        %s266 = scalar_lea.vmem %s0, %s265
        %s267 = smul.u32 %s26, 8
        %s268 = scalar_lea.vmem %s266, %s267
        %v269 = vld [vmem:[%s268] sm:$0xff]
        %v270 = vld [vmem:[#allocation2] sm:$0xff]
        %v271 = vld [vmem:[#allocation2 + $0x8] sm:$0xff]
        %v272 = vld [vmem:[#allocation2 + $0x10] sm:$0xff]
        %v273 = vld [vmem:[#allocation2 + $0x18] sm:$0xff]
        %s274 = sadd.s32 %s267, 1
        %s275 = scalar_lea.vmem %s266, %s274
        %v276 = vld [vmem:[%s275] sm:$0xff]
        %s277 = scalar_lea.vmem [#allocation2], 32
        %v278 = vld [vmem:[%s277] sm:$0xff]
        %v279 = vld [vmem:[%s277 + $0x8] sm:$0xff]
        %v280 = vld [vmem:[%s277 + $0x10] sm:$0xff]
        %v281 = vld [vmem:[%s277 + $0x18] sm:$0xff]
        %vm282 = vcmask 130048
        %v284 = vsel %vm282, %v276, 0
        %286 = vmatprep.subr.mxu0 %v279
        %287 = vmatpush1.msra.mxu0 %v278
        %288 = vmatprep.subr.mxu0 %v281
        %289 = vmatpush1.msra.mxu0 %v280
        %290 = vmatprep.subr.mxu0 0.0
        %291 = vmatpush1.msra.mxu0 0.0
        %292 = vmatprep.subr.mxu0 0.0
        %293 = vmatpush1.msra.mxu0 0.0
        %294 = vmatprep.subr.mxu0 0.0
        %295 = vmatpush1.msra.mxu0 0.0
        %296 = vmatprep.subr.mxu0 0.0
        %297 = vmatpush1.msra.mxu0 0.0
        %298 = vmatprep.subr.mxu0 0.0
        %299 = vmatpush1.msra.mxu0 0.0
        %300 = vmatprep.subr.mxu0 0.0
        %301 = vmatpush1.msra.mxu0 0.0
        %302 = vmatprep.subr.mxu0 0.0
        %303 = vmatpush1.msra.mxu0 0.0
        %304 = vmatprep.subr.mxu0 0.0
        %305 = vmatpush1.msra.mxu0 0.0
        %306 = vmatprep.subr.mxu0 0.0
        %307 = vmatpush1.msra.mxu0 0.0
        %308 = vmatprep.subr.mxu0 0.0
        %309 = vmatpush1.msra.mxu0 0.0
        %310 = vmatprep.subr.mxu0 0.0
        %311 = vmatpush1.msra.mxu0 0.0
        %312 = vmatprep.subr.mxu0 0.0
        %313 = vmatpush1.msra.mxu0 0.0
        %314 = vmatprep.subr.mxu0 0.0
        %315 = vmatpush1.msra.mxu0 0.0
        %316 = vmatprep.subr.mxu0 0.0
        %317 = vmatpush1.msra.mxu0 0.0
        %318 = vmatprep.subr.mxu0 0.0
        %319 = vmatpush1.msra.mxu0 0.0
        %320 = vmatprep.subr.mxu0 0.0
        %321 = vmatpush1.msra.mxu0 0.0
        %322 = vmatprep.subr.mxu0 0.0
        %323 = vmatpush1.msra.mxu0 0.0
        %324 = vmatprep.subr.mxu0 0.0
        %325 = vmatpush1.msra.mxu0 0.0
        %326 = vmatprep.subr.mxu0 0.0
        %327 = vmatpush1.msra.mxu0 0.0
        %328 = vmatprep.subr.mxu0 0.0
        %329 = vmatpush1.msra.mxu0 0.0
        %330 = vmatprep.subr.mxu0 0.0
        %331 = vmatpush1.msra.mxu0 0.0
        %332 = vmatprep.subr.mxu0 0.0
        %333 = vmatpush1.msra.mxu0 0.0
        %334 = vmatprep.subr.mxu0 0.0
        %335 = vmatpush1.msra.mxu0 0.0
        %336 = vmatprep.subr.mxu0 0.0
        %337 = vmatpush1.msra.mxu0 0.0
        %338 = vmatprep.subr.mxu0 0.0
        %339 = vmatpush1.msra.mxu0 0.0
        %340 = vmatprep.subr.mxu0 0.0
        %341 = vmatpush1.msra.mxu0 0.0
        %342 = vmatprep.subr.mxu0 0.0
        %343 = vmatpush1.msra.mxu0 0.0
        %344 = vmatprep.subr.mxu0 0.0
        %345 = vmatpush1.msra.mxu0 0.0
        %346 = vmatprep.subr.mxu0 0.0
        %347 = vmatpush1.msra.mxu0 0.0
        %348 = vmatprep.subr.mxu0 0.0
        %349 = vmatpush1.msra.mxu0 0.0
        %350 = vmatprep.mubr.f32.mxu0 0.0
        %351 = vmatmul.mubr.f32.gmra.mrb[0].mxu0 %v284
        %v352 = vpop.f32.mrb[0].mxu0
        %v353 = vadd.f32 0.0, %v352
        %v354 = vpop.f32.mrb[0].mxu0
        %v355 = vadd.f32 0.0, %v354
        %356 = vdwg.mxu0
        %v358 = vsel %vm282, %v269, 0
        %360 = vmatprep.subr.mxu0 %v271
        %361 = vmatpush1.msra.mxu0 %v270
        %362 = vmatprep.subr.mxu0 %v273
        %363 = vmatpush1.msra.mxu0 %v272
        %364 = vmatprep.subr.mxu0 0.0
        %365 = vmatpush1.msra.mxu0 0.0
        %366 = vmatprep.subr.mxu0 0.0
        %367 = vmatpush1.msra.mxu0 0.0
        %368 = vmatprep.subr.mxu0 0.0
        %369 = vmatpush1.msra.mxu0 0.0
        %370 = vmatprep.subr.mxu0 0.0
        %371 = vmatpush1.msra.mxu0 0.0
        %372 = vmatprep.subr.mxu0 0.0
        %373 = vmatpush1.msra.mxu0 0.0
        %374 = vmatprep.subr.mxu0 0.0
        %375 = vmatpush1.msra.mxu0 0.0
        %376 = vmatprep.subr.mxu0 0.0
        %377 = vmatpush1.msra.mxu0 0.0
        %378 = vmatprep.subr.mxu0 0.0
        %379 = vmatpush1.msra.mxu0 0.0
        %380 = vmatprep.subr.mxu0 0.0
        %381 = vmatpush1.msra.mxu0 0.0
        %382 = vmatprep.subr.mxu0 0.0
        %383 = vmatpush1.msra.mxu0 0.0
        %384 = vmatprep.subr.mxu0 0.0
        %385 = vmatpush1.msra.mxu0 0.0
        %386 = vmatprep.subr.mxu0 0.0
        %387 = vmatpush1.msra.mxu0 0.0
        %388 = vmatprep.subr.mxu0 0.0
        %389 = vmatpush1.msra.mxu0 0.0
        %390 = vmatprep.subr.mxu0 0.0
        %391 = vmatpush1.msra.mxu0 0.0
        %392 = vmatprep.subr.mxu0 0.0
        %393 = vmatpush1.msra.mxu0 0.0
        %394 = vmatprep.subr.mxu0 0.0
        %395 = vmatpush1.msra.mxu0 0.0
        %396 = vmatprep.subr.mxu0 0.0
        %397 = vmatpush1.msra.mxu0 0.0
        %398 = vmatprep.subr.mxu0 0.0
        %399 = vmatpush1.msra.mxu0 0.0
        %400 = vmatprep.subr.mxu0 0.0
        %401 = vmatpush1.msra.mxu0 0.0
        %402 = vmatprep.subr.mxu0 0.0
        %403 = vmatpush1.msra.mxu0 0.0
        %404 = vmatprep.subr.mxu0 0.0
        %405 = vmatpush1.msra.mxu0 0.0
        %406 = vmatprep.subr.mxu0 0.0
        %407 = vmatpush1.msra.mxu0 0.0
        %408 = vmatprep.subr.mxu0 0.0
        %409 = vmatpush1.msra.mxu0 0.0
        %410 = vmatprep.subr.mxu0 0.0
        %411 = vmatpush1.msra.mxu0 0.0
        %412 = vmatprep.subr.mxu0 0.0
        %413 = vmatpush1.msra.mxu0 0.0
        %414 = vmatprep.subr.mxu0 0.0
        %415 = vmatpush1.msra.mxu0 0.0
        %416 = vmatprep.subr.mxu0 0.0
        %417 = vmatpush1.msra.mxu0 0.0
        %418 = vmatprep.subr.mxu0 0.0
        %419 = vmatpush1.msra.mxu0 0.0
        %420 = vmatprep.subr.mxu0 0.0
        %421 = vmatpush1.msra.mxu0 0.0
        %422 = vmatprep.subr.mxu0 0.0
        %423 = vmatpush1.msra.mxu0 0.0
        %424 = vmatprep.mubr.f32.mxu0 0.0
        %425 = vmatmul.mubr.f32.gmra.mrb[0].mxu0 %v358
        %v426 = vpop.f32.mrb[0].mxu0
        %v427 = vadd.f32 %v353, %v426
        %v428 = vpop.f32.mrb[0].mxu0
        %v429 = vadd.f32 %v355, %v428
        %430 = vdwg.mxu0
        %v431 = vld [vmem:[%s2] sm:$0x3]
        %v433 = vlaneseq
        %v434 = vshrl.u32 %v433, 7
        %v435 = vsub.s32 0, %v434
        %v436 = vrot.slane %v431, %v435
        %v437 = vlaneseq
        %v438 = vshrl.u32 %v437, 7
        %v439 = vsub.s32 1, %v438
        %v440 = vrot.slane %v431, %v439
        %v443 = vadd.f32 %v427, %v436
        %v444 = vadd.f32 %v429, %v440
        %v445 = vxor.u32 %v444, 2147483648
        %v446 = vmul.f32 %v445, 1.442695
        %v447 = vpow.pop %v446
        %v448 = vadd.f32 %v447, 1.0
        %v449 = vrcp.pop %v448
        %v450 = vmul.f32 1.0, %v449
        %v451 = vmul.f32 %v443, %v450
        %v452 = vld [vmem:[#allocation5] sm:$0xff]
        %v453 = vld [vmem:[#allocation5 + $0x8] sm:$0xff]
        %v454 = vld [vmem:[#allocation5 + $0x10] sm:$0xff]
        %v455 = vld [vmem:[#allocation5 + $0x18] sm:$0xff]
        %v456 = vld [vmem:[#allocation5 + $0x20] sm:$0xff]
        %v457 = vld [vmem:[#allocation5 + $0x28] sm:$0xff]
        %v458 = vld [vmem:[#allocation5 + $0x30] sm:$0xff]
        %v459 = vld [vmem:[#allocation5 + $0x38] sm:$0xff]
        %v460 = vld [vmem:[#allocation5 + $0x40] sm:$0xff]
        %v461 = vld [vmem:[#allocation5 + $0x48] sm:$0xff]
        %v462 = vld [vmem:[#allocation5 + $0x50] sm:$0xff]
        %v463 = vld [vmem:[#allocation5 + $0x58] sm:$0xff]
        %v464 = vld [vmem:[#allocation5 + $0x60] sm:$0xff]
        %v465 = vld [vmem:[#allocation5 + $0x68] sm:$0xff]
        %v466 = vld [vmem:[#allocation5 + $0x70] sm:$0xff]
        %v467 = vld [vmem:[#allocation5 + $0x78] sm:$0xff]
        %v468 = vld [vmem:[%s4] sm:$0x1]
        %v470 = vlaneseq
        %v471 = vshrl.u32 %v470, 7
        %v472 = vsub.s32 0, %v471
        %v473 = vrot.slane %v468, %v472
        %475 = vmatprep.subr.mxu0 0.0
        %476 = vmatpush1.msra.mxu0 %v452
        %477 = vmatprep.subr.mxu0 0.0
        %478 = vmatpush1.msra.mxu0 %v453
        %479 = vmatprep.subr.mxu0 0.0
        %480 = vmatpush1.msra.mxu0 %v454
        %481 = vmatprep.subr.mxu0 0.0
        %482 = vmatpush1.msra.mxu0 %v455
        %483 = vmatprep.subr.mxu0 0.0
        %484 = vmatpush1.msra.mxu0 %v456
        %485 = vmatprep.subr.mxu0 0.0
        %486 = vmatpush1.msra.mxu0 %v457
        %487 = vmatprep.subr.mxu0 0.0
        %488 = vmatpush1.msra.mxu0 %v458
        %489 = vmatprep.subr.mxu0 0.0
        %490 = vmatpush1.msra.mxu0 %v459
        %491 = vmatprep.subr.mxu0 0.0
        %492 = vmatpush1.msra.mxu0 %v460
        %493 = vmatprep.subr.mxu0 0.0
        %494 = vmatpush1.msra.mxu0 %v461
        %495 = vmatprep.subr.mxu0 0.0
        %496 = vmatpush1.msra.mxu0 %v462
        %497 = vmatprep.subr.mxu0 0.0
        %498 = vmatpush1.msra.mxu0 %v463
        %499 = vmatprep.subr.mxu0 0.0
        %500 = vmatpush1.msra.mxu0 %v464
        %501 = vmatprep.subr.mxu0 0.0
        %502 = vmatpush1.msra.mxu0 %v465
        %503 = vmatprep.subr.mxu0 0.0
        %504 = vmatpush1.msra.mxu0 %v466
        %505 = vmatprep.subr.mxu0 0.0
        %506 = vmatpush1.msra.mxu0 %v467
        %507 = vmatprep.subr.mxu0 0.0
        %508 = vmatpush1.msra.mxu0 0.0
        %509 = vmatprep.subr.mxu0 0.0
        %510 = vmatpush1.msra.mxu0 0.0
        %511 = vmatprep.subr.mxu0 0.0
        %512 = vmatpush1.msra.mxu0 0.0
        %513 = vmatprep.subr.mxu0 0.0
        %514 = vmatpush1.msra.mxu0 0.0
        %515 = vmatprep.subr.mxu0 0.0
        %516 = vmatpush1.msra.mxu0 0.0
        %517 = vmatprep.subr.mxu0 0.0
        %518 = vmatpush1.msra.mxu0 0.0
        %519 = vmatprep.subr.mxu0 0.0
        %520 = vmatpush1.msra.mxu0 0.0
        %521 = vmatprep.subr.mxu0 0.0
        %522 = vmatpush1.msra.mxu0 0.0
        %523 = vmatprep.subr.mxu0 0.0
        %524 = vmatpush1.msra.mxu0 0.0
        %525 = vmatprep.subr.mxu0 0.0
        %526 = vmatpush1.msra.mxu0 0.0
        %527 = vmatprep.subr.mxu0 0.0
        %528 = vmatpush1.msra.mxu0 0.0
        %529 = vmatprep.subr.mxu0 0.0
        %530 = vmatpush1.msra.mxu0 0.0
        %531 = vmatprep.subr.mxu0 0.0
        %532 = vmatpush1.msra.mxu0 0.0
        %533 = vmatprep.subr.mxu0 0.0
        %534 = vmatpush1.msra.mxu0 0.0
        %535 = vmatprep.subr.mxu0 0.0
        %536 = vmatpush1.msra.mxu0 0.0
        %537 = vmatprep.subr.mxu0 0.0
        %538 = vmatpush1.msra.mxu0 0.0
        %539 = vmatprep.mubr.f32.mxu0 0.0
        %540 = vmatmul.mubr.f32.gmra.mrb[0].mxu0 %v451
        %v541 = vpop.f32.mrb[0].mxu0
        %v542 = vadd.f32 %v473, %v541
        %v543 = vpop.f32.mrb[0].mxu0
        %544 = vdwg.mxu0
        %545 = vst [vmem:[%s261] sm:$0xff] %v542
        %s546 = sand.u32 %s153, 1
        %s547 = scalar_lea.sflag [#allocation4], %s546
        %s548 = sand.u32 %s153, 1
        %s549 = smul.addr %s548, 8
        %s550 = scalar_lea.vmem [#allocation7], %s549
        // Predicated region
        $region49: #{tpu_custom_call.1} parent=39 // pred_check
          %p551 = pneg %p163
        $region50: #{tpu_custom_call.1} parent=39 // pred_check_branch
          %553 = sbr.rel (%p551) target = $region52
        $region51: #{tpu_custom_call.1} parent=39 // pred_region
          %s555 = ssub.s32 128, 128
          %556 = vsyncadd %s547, %s555
          %s557 = sadd.s32 %s26, %s25
          %s558 = smul.addr %s557, 128
          %s559 = scalar_lea.hbm %s5, %s558
          %s561 = sshll.u32 %s550, 4
          %s562 = int_to_ptr.vmem [resolvable:$true] %s561
          %564 = dma.vmem_to_hbm [thread:$0]  %s562, 128, %s559, %s547
        $region52: #{tpu_custom_call.1} parent=39 // pred_fallthru
          _
      $region40: #{tpu_custom_call.1} parent=5 // pred_fallthru
        _
      %p565 = scmp.le.s32.totalorder 2, %s16
      // Predicated region
      $region53: #{tpu_custom_call.1} parent=5 // pred_check
        %p566 = pneg %p565
      $region54: #{tpu_custom_call.1} parent=5 // pred_check_branch
        %568 = sbr.rel (%p566) target = $region56
      $region55: #{tpu_custom_call.1} parent=5 // pred_region
        %s569 = ssub.s32 %s16, 2
        // Predicated region
        $region57: #{tpu_custom_call.1} parent=55 // pred_check
          %p570 = pneg %p169
        $region58: #{tpu_custom_call.1} parent=55 // pred_check_branch
          %572 = sbr.rel (%p570) target = $region60
        $region59: #{tpu_custom_call.1} parent=55 // pred_region
          %s573 = sand.u32 %s154, 1
          %s574 = scalar_lea.sflag [#allocation4], %s573
          %s575 = sand.u32 %s154, 1
          %s576 = smul.addr %s575, 8
          %s577 = scalar_lea.vmem [#allocation7], %s576
          %578 = dma.done %s574, 128
        $region60: #{tpu_custom_call.1} parent=55 // pred_fallthru
          _
      $region56: #{tpu_custom_call.1} parent=5 // pred_fallthru
        _
    $region6: #{tpu_custom_call.1} parent=1 // loop_footer
      %s20 = sadd.s32 1, %s16
    $region7: #{tpu_custom_call.1} parent=1 // loop_footer_branch
      %15 = sbr.rel target = $region3
    $region8: #{tpu_custom_call.1} parent=1 // loop_exit
      _
    %579 = vsyncpa [#allocation3], 1
    %s580 = scalar_lea.sflag [#allocation3], 1
    %581 = vsyncpa %s580, 1
    %582 = vsyncpa [#allocation6], 1
    %583 = vsyncpa [#allocation4], 1
    %s584 = scalar_lea.sflag [#allocation4], 1
    %585 = vsyncpa %s584, 1

</llo_original>
